<compile_context>
chip_gen: v5e
topology: v5e:2x2
jax: 0.10.0
libtpu: 0.0.40
codegen_flags: <defaults>
</compile_context>

<pallas_src>
import numpy as np
import jax
import jax.numpy as jnp
from jax.experimental import pallas as pl
from jax.experimental.pallas import tpu as pltpu


# ----------------------------- Pallas kernel -----------------------------

def _skinny_matmul_kernel(a_ref, b_ref, o_ref):
    # Full-K block, no reduction grid axis: one MXU dot per grid step.
    # (Output kept f32; switching the store to bf16 would halve writeback
    #  bytes for large out_channel -- left f32 for numerics here.)
    o_ref[...] = jnp.dot(a_ref[...], b_ref[...],
                         preferred_element_type=jnp.float32)


def _round_up(x, m):
    return ((x + m - 1) // m) * m


def _vmem_budget_bytes():
    """Generation-aware scoped-VMEM budget (conservative defaults)."""
    try:
        kind = jax.devices()[0].device_kind.lower()
    except Exception:
        kind = ""
    if ("v5" in kind) or ("v6" in kind):
        return 96 * 1024 * 1024        # 128 MiB physical VMEM
    return 48 * 1024 * 1024            # v7x (64 MiB physical) / unknown: be safe


def _vmem_estimate(tm, tn, Kp, a_item, b_item, o_item=4):
    # Conservatively assume every BlockSpec operand is double-buffered.
    return 2 * tm * Kp * a_item + 2 * Kp * tn * b_item + 2 * tm * tn * o_item


def pallas_skinny_matmul(a: jax.Array, b: jax.Array, *, tm: int, tn: int,
                         vmem_limit_bytes: int):
    """a: (Mp, Kp), b: (Kp, Ncols)  ->  (Mp, Ncols) float32."""
    Mp, Kp = a.shape
    Kp2, Ncols = b.shape
    assert Kp == Kp2
    nb_n = pl.cdiv(Ncols, tn)
    nb_m = pl.cdiv(Mp, tm)

    if nb_m == 1:
        # Weight tile fully VMEM-resident (constant index_map): X_col is read
        # from HBM exactly once over the 1-D N sweep.
        grid = (nb_n,)
        in_specs = [pl.BlockSpec((tm, Kp), lambda j: (0, 0)),
                    pl.BlockSpec((Kp, tn), lambda j: (0, j))]
        out_specs = pl.BlockSpec((tm, tn), lambda j: (0, j))
        dim_sem = ("parallel",)
    else:
        # N outer, M inner: activation block constant across the inner M sweep,
        # so X_col still streams exactly once; only the small weight re-fetches.
        grid = (nb_n, nb_m)
        in_specs = [pl.BlockSpec((tm, Kp), lambda j, i: (i, 0)),
                    pl.BlockSpec((Kp, tn), lambda j, i: (0, j))]
        out_specs = pl.BlockSpec((tm, tn), lambda j, i: (i, j))
        dim_sem = ("parallel", "arbitrary")

    # NOTE: if xprof shows exposed DMA gaps between back-to-back B fetches,
    # pipeline_mode=pl.Buffered(3) on in_specs[1] is a small free win (kept off
    # to preserve the v7x VMEM budget).
    return pl.pallas_call(
        _skinny_matmul_kernel,
        out_shape=jax.ShapeDtypeStruct((Mp, Ncols), jnp.float32),
        grid_spec=pltpu.PrefetchScalarGridSpec(
            num_scalar_prefetch=0,
            grid=grid,
            in_specs=in_specs,
            out_specs=out_specs,
        ),
        compiler_params=pltpu.CompilerParams(
            dimension_semantics=dim_sem,
            vmem_limit_bytes=vmem_limit_bytes),
    )(a, b)


# ------------------------------- JAX glue --------------------------------

def im2col_2d(x, k, stride, padding, k_pad_to=None, dtype=None):
    """F.unfold-equivalent.  Returns (Kp, N*h_out*w_out) with BATCH-MAJOR
    columns (batch outer, spatial minor): the layout change from (N, K, L) is
    a near-free leading-axis transpose (no minor-dim transpose of the
    k^2-amplified tensor).  Optional zero-pad of K (fused into the single
    materialization) and dtype cast."""
    N, C, H, W = x.shape
    h_out = (H - k + 2 * padding) // stride + 1
    w_out = (W - k + 2 * padding) // stride + 1
    if dtype is not None:
        x = x.astype(dtype)
    xp = jnp.pad(x, ((0, 0), (0, 0), (padding, padding), (padding, padding)))
    patches = []
    for kh in range(k):
        for kw in range(k):
            patches.append(xp[:, :,
                              kh:kh + stride * h_out:stride,
                              kw:kw + stride * w_out:stride])
    # (N, C, k*k, h_out, w_out); within-channel index kh*k + kw (unfold order)
    patches = jnp.stack(patches, axis=2)
    patches = patches.reshape(N, C * k * k, h_out * w_out)
    K = C * k * k
    if k_pad_to is not None and k_pad_to > K:
        patches = jnp.pad(patches, ((0, 0), (0, k_pad_to - K), (0, 0)))
    x_col = patches.transpose(1, 0, 2).reshape(patches.shape[1],
                                               N * h_out * w_out)
    return x_col, h_out, w_out


class SuperBlockConv2dPallas:
    def __init__(self, in_channel, out_channel, kernel_size=3, mini_block=8,
                 stride=1, padding=0, photodetect=False, use_bf16=True,
                 key=None):
        assert not photodetect, "photodetect=False path implemented (module default)"
        self.in_channel = in_channel
        self.out_channel = out_channel
        self.kernel_size = kernel_size
        self.mini_block = mini_block
        self.stride = stride
        self.padding = padding
        self.use_bf16 = use_bf16

        n = in_channel * kernel_size ** 2
        if in_channel % 2 == 0:
            self.grid_dim_x = 2 * int(np.ceil(n / 2 / mini_block))
        else:
            self.grid_dim_x = int(np.ceil(n // 2 / mini_block)) + \
                int(np.ceil((n - n // 2) / mini_block))
        self.grid_dim_y = int(np.ceil(out_channel / mini_block))
        self.in_channel_pad = self.grid_dim_x * mini_block
        self.out_channel_pad = self.grid_dim_y * mini_block
        self.n = n

        # -------- reset_parameters (mirrors kaiming_normal_ + svd sigma) --------
        if key is None:
            key = jax.random.PRNGKey(0)
        fan_in = self.grid_dim_x * mini_block
        std = float(np.sqrt(2.0 / fan_in))        # kaiming_normal_, leaky_relu a=0
        temp = std * jax.random.normal(
            key, (self.grid_dim_y * mini_block, self.grid_dim_x * mini_block),
            dtype=jnp.float32)
        temp = temp.reshape(self.grid_dim_y, mini_block,
                            self.grid_dim_x, mini_block).transpose(0, 2, 1, 3)
        sigma = jnp.linalg.svd(temp, compute_uv=False)   # (gy, gx, mini_block)
        self.sigma = sigma.astype(jnp.float32)           # torch stores cfloat; values real

    def _build_weight(self):
        # U = V = eye  =>  block (p, q) = diag(sigma[p, q])
        blocks = jax.vmap(jax.vmap(jnp.diag))(self.sigma)          # (gy, gx, mb, mb)
        w_full = blocks.transpose(0, 2, 1, 3).reshape(
            self.out_channel_pad, self.in_channel_pad)
        return w_full[:self.out_channel, :self.n]                   # (out_c, C*k*k)

    def __call__(self, x):
        k = self.kernel_size
        cdt = jnp.bfloat16 if self.use_bf16 else jnp.float32
        item = 2 if self.use_bf16 else 4

        weight = self._build_weight()                               # (out_c, K) f32
        inc_pos = int(np.ceil(weight.shape[1] / 2))
        # x_pos - x_neg == concat(W[:, :inc], -W[:, inc:]) @ X   (single GEMM)
        w_signed = jnp.concatenate(
            [weight[:, :inc_pos], -weight[:, inc_pos:]], axis=1)

        M, K = w_signed.shape
        Mp = _round_up(M, 8)
        Kp = _round_up(K, 16 if self.use_bf16 else 8)   # bf16 sublane packing

        a = jnp.zeros((Mp, Kp), cdt).at[:M, :K].set(w_signed.astype(cdt))

        x_col, h_out, w_out = im2col_2d(x, k, self.stride, self.padding,
                                        k_pad_to=Kp, dtype=cdt)     # (Kp, N*L)
        N = x.shape[0]
        Ncols = x_col.shape[1]

        budget = _vmem_budget_bytes()
        # Keep the weight fully VMEM-resident whenever it fits (so the big
        # activation stream is read from HBM exactly once); otherwise fall
        # back to 128-row weight tiles with M as the inner grid axis.
        if _vmem_estimate(Mp, 128, Kp, item, item) <= budget:
            tm = Mp
        else:
            tm = min(Mp, 128)

        # Lane-dense streamed tile; no minimum-N-blocks shrink (see header).
        tn = min(512, _round_up(Ncols, 128))
        while tn > 128 and _vmem_estimate(tm, tn, Kp, item, item) > budget:
            tn //= 2
        tn = max(128, (tn // 128) * 128)

        out = pallas_skinny_matmul(a, x_col, tm=tm, tn=tn,
                                   vmem_limit_bytes=budget)         # (Mp, N*L) f32
        out = out[:M]                                                # (out_c, N*L)
        # batch-major columns -> cheap leading-axis swap to NCHW
        out = out.reshape(self.out_channel, N, h_out, w_out).transpose(1, 0, 2, 3)
        # PyTorch result is complex64 (weight is cfloat, photodetect=False);
        # real inputs + real diag(sigma) weights => imaginary part is zero.
        return out.astype(jnp.complex64)


# --------------------------------- main ----------------------------------

if __name__ == "__main__":
    key = jax.random.PRNGKey(0)
    k_w, k_x = jax.random.split(key)

    in_channel, out_channel, ksize = 4, 8, 3
    layer = SuperBlockConv2dPallas(in_channel, out_channel, kernel_size=ksize,
                                   mini_block=8, stride=1, padding=1,
                                   photodetect=False, use_bf16=True, key=k_w)

    x = jax.random.normal(k_x, (2, in_channel, 16, 16), dtype=jnp.float32)

    out = jax.block_until_ready(layer(x))
    out_real = np.real(np.asarray(out))

    # Reference 1: same bf16-quantized operands, plain GEMM on the same
    # batch-major im2col columns (checks the Pallas matmul itself).
    weight = layer._build_weight()
    inc_pos = int(np.ceil(weight.shape[1] / 2))
    w_signed = jnp.concatenate([weight[:, :inc_pos], -weight[:, inc_pos:]], axis=1)
    w_q = w_signed.astype(jnp.bfloat16).astype(jnp.float32)
    x_col_f32, h_out, w_out = im2col_2d(x, ksize, 1, 1)
    x_q = x_col_f32.astype(jnp.bfloat16).astype(jnp.float32)
    ref1 = (w_q @ x_q).reshape(out_channel, x.shape[0], h_out, w_out)
    ref1 = ref1.transpose(1, 0, 2, 3)
    np.testing.assert_allclose(out_real, np.asarray(ref1), rtol=1e-4, atol=1e-4)

    # Reference 2: end-to-end check against a real convolution with the signed
    # weight (validates the batch-major im2col ordering + output reordering).
    w_conv = w_q.reshape(out_channel, in_channel, ksize, ksize)      # OIHW
    x_q_img = x.astype(jnp.bfloat16).astype(jnp.float32)
    ref2 = jax.lax.conv_general_dilated(
        x_q_img, w_conv, window_strides=(1, 1), padding=((1, 1), (1, 1)),
        dimension_numbers=("NCHW", "OIHW", "NCHW"),
        precision=jax.lax.Precision.HIGHEST)
    np.testing.assert_allclose(out_real, np.asarray(ref2), rtol=1e-3, atol=1e-3)

    assert out.shape == (2, out_channel, 16, 16) and out.dtype == jnp.complex64

    print("KERNEL_OK")
</pallas_src>

<mosaic_0001>
module attributes {stable_mosaic.version = 11 : i64} {
  func.func @_skinny_matmul_kernel(%arg0: i32, %arg1: memref<8x48xbf16, #tpu.memory_space<vmem>>, %arg2: memref<48x512xbf16, #tpu.memory_space<vmem>>, %arg3: memref<8x512xf32, #tpu.memory_space<vmem>>) attributes {dimension_semantics = [#tpu.dimension_semantics<parallel>], iteration_bounds = array<i64: 1>, scalar_prefetch = 0 : i64, scratch_operands = 0 : i64, tpu.core_type = #tpu.core_type<tc>, window_params = [{pipeline_mode = #tpu.pipeline_mode<synchronous>, transform_indices = @transform_0, window_bounds = array<i64: 8, 48>}, {transform_indices = @transform_1, window_bounds = array<i64: 48, 512>}, {transform_indices = @transform_2, window_bounds = array<i64: 8, 512>}]} {
    %c0 = arith.constant 0 : index
    %c0_0 = arith.constant 0 : index
    %0 = vector.load %arg1[%c0, %c0_0] : memref<8x48xbf16, #tpu.memory_space<vmem>>, vector<8x48xbf16>
    %c0_1 = arith.constant 0 : index
    %c0_2 = arith.constant 0 : index
    %1 = vector.load %arg2[%c0_1, %c0_2] : memref<48x512xbf16, #tpu.memory_space<vmem>>, vector<48x512xbf16>
    %cst = arith.constant dense<0.000000e+00> : vector<8x512xf32>
    %2 = tpu.matmul %0, %1, %cst {dimension_numbers = #tpu.dot_dimension_numbers<[1], [0], [0], [1], [0, 0, 1, 1], [], []>} : vector<8x48xbf16>, vector<48x512xbf16>, vector<8x512xf32> -> vector<8x512xf32>
    %c0_3 = arith.constant 0 : index
    %c0_4 = arith.constant 0 : index
    %3 = vector.load %arg3[%c0_3, %c0_4] : memref<8x512xf32, #tpu.memory_space<vmem>>, vector<8x512xf32>
    tpu.vector_store %arg3[%c0_3, %c0_4], %2 {strides = array<i32>} : memref<8x512xf32, #tpu.memory_space<vmem>>, vector<8x512xf32>,
    return
  }
  func.func @transform_0(%arg0: i32) -> (i32, i32) {
    %c0_i32 = arith.constant 0 : i32
    %c0_i32_0 = arith.constant 0 : i32
    %c0_i32_1 = arith.constant 0 : i32
    return %c0_i32, %c0_i32_0 : i32, i32
  }
  func.func @transform_1(%arg0: i32) -> (i32, i32) {
    %c0_i32 = arith.constant 0 : i32
    %c0_i32_0 = arith.constant 0 : i32
    return %c0_i32, %arg0 : i32, i32
  }
  func.func @transform_2(%arg0: i32) -> (i32, i32) {
    %c0_i32 = arith.constant 0 : i32
    %c0_i32_0 = arith.constant 0 : i32
    return %c0_i32, %arg0 : i32, i32
  }
}

</mosaic_0001>

<llo_original>
// kernel: tpu_custom_call.1
$region0: #{tpu_custom_call.1}
  #allocation0 [shape = 'u32[]', space=smem, size = 0x4, offset = 0x4, fixed_abs, tag = 'smem constant byte address 0x4 - core index']
  #allocation1 [shape = 'u32[72,128]{1,0:T(1,128)}', space=vmem, size = 0x9000, scoped, tag = 'internal scratch']
  %s0 = inlined_call_operand.hbm [shape: bf16[8,48], index: 0, kind: input, shape index: {}]
  %s1 = inlined_call_operand.hbm [shape: bf16[48,512], index: 1, kind: input, shape index: {}]
  %s2 = inlined_call_operand.hbm [shape: f32[8,512], index: 2, kind: output, shape index: {}]
  %s3 = sld [smem:[#allocation0]]
  $region26: #{tpu_custom_call.1} parent=0
    _
  %s5 = ssub.s32 1, %s3
  %s6 = scalar_select 0, %s5, %s3
  $region1: #{tpu_custom_call.1} parent=0
    #allocation2 [shape = 'u8[2048]{0}', space=vmem, size = 0x800, scoped, tag = 'input window, operand 0, single buffered']
    #allocation3 [shape = 's32[1]{0}', space=sflag, size = 0x4, scoped, tag = 'scoped memory for tpu_custom_call.1']
    #allocation4 [shape = 's32[1]{0}', space=sflag, size = 0x4, scoped, tag = 'scoped memory for tpu_custom_call.1']
    #allocation5 [shape = 'u8[49152]{0}', space=vmem, size = 0xc000, scoped, tag = 'input window, operand 1, single buffered']
    #allocation6 [shape = 's32[1]{0}', space=sflag, size = 0x4, scoped, tag = 'scoped memory for tpu_custom_call.1']
    #allocation7 [shape = 'u8[16384]{0}', space=vmem, size = 0x4000, scoped, tag = 'output window, operand 0, single buffered']
    %7 = vsyncpa [#allocation3], 0
    %8 = vsyncpa [#allocation6], 0
    %9 = vsyncpa [#allocation4], 0
    // Predicated region
    $region2: #{tpu_custom_call.1} parent=1 // pred_check
      _
    $region3: #{tpu_custom_call.1} parent=1 // pred_check_branch
      %11 = sbr.rel (0) target = $region5
    $region4: #{tpu_custom_call.1} parent=1 // pred_region
      %13 = vsyncadd [#allocation3], 0
      %s15 = sshll.u32 %s0, 4
      %s16 = int_to_ptr.hbm [resolvable:$true] %s15
      %s17 = sshll.u32 [#allocation2], 4
      %s18 = int_to_ptr.vmem [resolvable:$true] %s17
      %20 = dma.hbm_to_vmem [thread:$0]  %s16, 64, %s18, [#allocation3]
    $region5: #{tpu_custom_call.1} parent=1 // pred_fallthru
      _
    // Predicated region
    $region6: #{tpu_custom_call.1} parent=1 // pred_check
      _
    $region7: #{tpu_custom_call.1} parent=1 // pred_check_branch
      %22 = sbr.rel (0) target = $region9
    $region8: #{tpu_custom_call.1} parent=1 // pred_region
      %24 = vsyncadd [#allocation6], 0
      %s25 = sshll.u32 %s1, 4
      %s26 = int_to_ptr.hbm [resolvable:$true] %s25
      %s27 = sshll.u32 [#allocation5], 4
      %s28 = int_to_ptr.vmem [resolvable:$true] %s27
      %33 = dma.hbm_to_vmem [thread:$0]  %s26, 1536, %s28, [#allocation6], 256, 256, 16
    $region9: #{tpu_custom_call.1} parent=1 // pred_fallthru
      _
    // Predicated region
    $region10: #{tpu_custom_call.1} parent=1 // pred_check
      _
    $region11: #{tpu_custom_call.1} parent=1 // pred_check_branch
      %35 = sbr.rel (0) target = $region13
    $region12: #{tpu_custom_call.1} parent=1 // pred_region
      %37 = dma.done [#allocation3], 64
    $region13: #{tpu_custom_call.1} parent=1 // pred_fallthru
      _
    // Predicated region
    $region14: #{tpu_custom_call.1} parent=1 // pred_check
      _
    $region15: #{tpu_custom_call.1} parent=1 // pred_check_branch
      %39 = sbr.rel (0) target = $region17
    $region16: #{tpu_custom_call.1} parent=1 // pred_region
      %41 = dma.done [#allocation6], 1536
    $region17: #{tpu_custom_call.1} parent=1 // pred_fallthru
      _
    %v43 = vld [vmem:[#allocation2] sm:$0xf]
    %v44 = vld [vmem:[#allocation5] sm:$0xff]
    %v45 = vld [vmem:[#allocation5 + $0x8] sm:$0xff]
    %v46 = vld [vmem:[#allocation5 + $0x10] sm:$0xff]
    %v47 = vld [vmem:[#allocation5 + $0x18] sm:$0xff]
    %v48 = vld [vmem:[#allocation5 + $0x20] sm:$0xff]
    %v49 = vld [vmem:[#allocation5 + $0x28] sm:$0xff]
    %v50 = vld [vmem:[#allocation5 + $0x30] sm:$0xff]
    %v51 = vld [vmem:[#allocation5 + $0x38] sm:$0xff]
    %v52 = vld [vmem:[#allocation5 + $0x40] sm:$0xff]
    %v53 = vld [vmem:[#allocation5 + $0x48] sm:$0xff]
    %v54 = vld [vmem:[#allocation5 + $0x50] sm:$0xff]
    %v55 = vld [vmem:[#allocation5 + $0x58] sm:$0xff]
    %v68 = vunpack.c.l.b16 %v44
    %v69 = vunpack.c.h.b16 %v44
    %v70 = vunpack.c.l.b16 %v45
    %v71 = vunpack.c.h.b16 %v45
    %v72 = vunpack.c.l.b16 %v46
    %v73 = vunpack.c.h.b16 %v46
    %v74 = vunpack.c.l.b16 %v47
    %v75 = vunpack.c.h.b16 %v47
    %v76 = vunpack.c.l.b16 %v48
    %v77 = vunpack.c.h.b16 %v48
    %v78 = vunpack.c.l.b16 %v49
    %v79 = vunpack.c.h.b16 %v49
    %v80 = vunpack.c.l.b16 %v50
    %v81 = vunpack.c.h.b16 %v50
    %v82 = vunpack.c.l.b16 %v51
    %v83 = vunpack.c.h.b16 %v51
    %v84 = vunpack.c.l.b16 %v52
    %v85 = vunpack.c.h.b16 %v52
    %v86 = vunpack.c.l.b16 %v53
    %v87 = vunpack.c.h.b16 %v53
    %v88 = vunpack.c.l.b16 %v54
    %v89 = vunpack.c.h.b16 %v54
    %v90 = vunpack.c.l.b16 %v55
    %v91 = vunpack.c.h.b16 %v55
    %v92 = vpack.c.b16 %v72, %v68
    %v93 = vpack.c.b16 %v73, %v69
    %v94 = vpack.c.b16 %v74, %v70
    %v95 = vpack.c.b16 %v75, %v71
    %v96 = vpack.c.b16 %v80, %v76
    %v97 = vpack.c.b16 %v81, %v77
    %v98 = vpack.c.b16 %v82, %v78
    %v99 = vpack.c.b16 %v83, %v79
    %v100 = vpack.c.b16 %v88, %v84
    %v101 = vpack.c.b16 %v89, %v85
    %v102 = vpack.c.b16 %v90, %v86
    %v103 = vpack.c.b16 %v91, %v87
    %vm116 = vcmask 392192
    %v118 = vsel %vm116, %v43, 0
    %120 = vmatpush.bf16.msra.mxu0 0
    %121 = vmatpush.bf16.msra.mxu0 0
    %122 = vmatpush.bf16.msra.mxu0 0
    %123 = vmatpush.bf16.msra.mxu0 0
    %124 = vmatpush.bf16.msra.mxu0 0
    %125 = vmatpush.bf16.msra.mxu0 %v100
    %126 = vmatpush.bf16.msra.mxu0 %v96
    %127 = vmatpush.bf16.msra.mxu0 %v92
    %128 = vmatmul.bf16.gmra.mxu0 %v118
    %v129 = vpop.f32.mrf.mxu0
    %v130 = vadd.f32 0.0, %v129
    %v131 = vpop.f32.mrf.mxu0
    %132 = vdwg.mxu0
    %133 = vmatpush.bf16.msra.mxu0 0
    %134 = vmatpush.bf16.msra.mxu0 0
    %135 = vmatpush.bf16.msra.mxu0 0
    %136 = vmatpush.bf16.msra.mxu0 0
    %137 = vmatpush.bf16.msra.mxu0 0
    %138 = vmatpush.bf16.msra.mxu0 %v101
    %139 = vmatpush.bf16.msra.mxu0 %v97
    %140 = vmatpush.bf16.msra.mxu0 %v93
    %141 = vmatmul.bf16.gmra.mxu0 %v118
    %v142 = vpop.f32.mrf.mxu0
    %v143 = vadd.f32 0.0, %v142
    %v144 = vpop.f32.mrf.mxu0
    %145 = vdwg.mxu0
    %146 = vmatpush.bf16.msra.mxu0 0
    %147 = vmatpush.bf16.msra.mxu0 0
    %148 = vmatpush.bf16.msra.mxu0 0
    %149 = vmatpush.bf16.msra.mxu0 0
    %150 = vmatpush.bf16.msra.mxu0 0
    %151 = vmatpush.bf16.msra.mxu0 %v102
    %152 = vmatpush.bf16.msra.mxu0 %v98
    %153 = vmatpush.bf16.msra.mxu0 %v94
    %154 = vmatmul.bf16.gmra.mxu0 %v118
    %v155 = vpop.f32.mrf.mxu0
    %v156 = vadd.f32 0.0, %v155
    %v157 = vpop.f32.mrf.mxu0
    %158 = vdwg.mxu0
    %159 = vmatpush.bf16.msra.mxu0 0
    %160 = vmatpush.bf16.msra.mxu0 0
    %161 = vmatpush.bf16.msra.mxu0 0
    %162 = vmatpush.bf16.msra.mxu0 0
    %163 = vmatpush.bf16.msra.mxu0 0
    %164 = vmatpush.bf16.msra.mxu0 %v103
    %165 = vmatpush.bf16.msra.mxu0 %v99
    %166 = vmatpush.bf16.msra.mxu0 %v95
    %167 = vmatmul.bf16.gmra.mxu0 %v118
    %v168 = vpop.f32.mrf.mxu0
    %v169 = vadd.f32 0.0, %v168
    %v170 = vpop.f32.mrf.mxu0
    %171 = vdwg.mxu0
    %172 = vst [vmem:[#allocation7] sm:$0xff] %v130
    %173 = vst [vmem:[#allocation7 + $0x8] sm:$0xff] %v143
    %174 = vst [vmem:[#allocation7 + $0x10] sm:$0xff] %v156
    %175 = vst [vmem:[#allocation7 + $0x18] sm:$0xff] %v169
    // Predicated region
    $region18: #{tpu_custom_call.1} parent=1 // pred_check
      _
    $region19: #{tpu_custom_call.1} parent=1 // pred_check_branch
      %177 = sbr.rel (0) target = $region21
    $region20: #{tpu_custom_call.1} parent=1 // pred_region
      %179 = vsyncadd [#allocation4], 0
      %s181 = sshll.u32 [#allocation7], 4
      %s182 = int_to_ptr.vmem [resolvable:$true] %s181
      %s183 = sshll.u32 %s2, 4
      %s184 = int_to_ptr.hbm [resolvable:$true] %s183
      %186 = dma.vmem_to_hbm [thread:$0]  %s182, 512, %s184, [#allocation4]
    $region21: #{tpu_custom_call.1} parent=1 // pred_fallthru
      _
    // Predicated region
    $region22: #{tpu_custom_call.1} parent=1 // pred_check
      _
    $region23: #{tpu_custom_call.1} parent=1 // pred_check_branch
      %188 = sbr.rel (0) target = $region25
    $region24: #{tpu_custom_call.1} parent=1 // pred_region
      %190 = dma.done [#allocation4], 512
    $region25: #{tpu_custom_call.1} parent=1 // pred_fallthru
      _
    %191 = vsyncpa [#allocation3], 1
    %192 = vsyncpa [#allocation6], 1
    %193 = vsyncpa [#allocation4], 1

</llo_original>
